<compile_context>
chip_gen: v6e
topology: v6e:2x2x1
jax: 0.10.0
libtpu: 0.0.40
codegen_flags: <defaults>
</compile_context>

<pallas_src>
import jax
import jax.numpy as jnp
from jax.experimental import pallas as pl
from jax.experimental.pallas import tpu as pltpu

_SUBLANE = 16                       # bf16 minimum sublane tile (2nd-to-last dim)
_LANE = 128                         # lane tile (last dim)
_VMEM_BUDGET = 28 * 1024 * 1024     # conservative working-set cap (v7x: 64 MiB phys)


def _round_up(x, m):
    return ((x + m - 1) // m) * m


def _balanced_tile(dim, tile_default, granule):
    """Tile <= tile_default (granule-rounded) chosen to minimize padding waste.

    Returns (tile, num_blocks) with num_blocks * tile >= dim and
    num_blocks * tile - dim < granule + tile padding balanced across blocks.
    """
    t = min(_round_up(tile_default, granule), _round_up(dim, granule))
    nblk = pl.cdiv(dim, t)
    t = _round_up(pl.cdiv(dim, nblk), granule)
    return t, nblk


def _adaptive_inhibition_kernel(thr_ref, x_ref, w_ref, bs_ref, o_ref):
    k = pl.program_id(2)

    @pl.when(k == 0)
    def _init():
        o_ref[...] = jnp.zeros_like(o_ref)

    # Pure-MXU inner loop: bf16 inputs, f32 accumulation directly in the
    # resident output tile (out BlockSpec returns (i, j) for every k, so no
    # separate VMEM accumulator scratch is needed).
    o_ref[...] += jnp.dot(x_ref[...], w_ref[...],
                          preferred_element_type=jnp.float32)

    # Epilogue only on the last K step: bias + sigmoid + slow-modulation + threshold.
    @pl.when(k == pl.num_programs(2) - 1)
    def _epilogue():
        bias = bs_ref[0:1, :]          # [1, tn] -> broadcast over rows
        slow = bs_ref[1:2, :]          # [1, tn]
        z = o_ref[...] + bias
        inhib = jax.nn.sigmoid(z) * slow          # EUP sigmoid + VPU mul
        thr = thr_ref[0]                          # scalar from SMEM
        # F.threshold(v, thr, 0): keep v where v > thr (strict), else 0.
        o_ref[...] = jnp.where(inhib > thr, inhib, 0.0)


def make_adaptive_inhibition(weight, bias, slow_modulation, adaptive_threshold,
                             *, tm=256, tn=1024, tk=2048, w_buffer_count=2,
                             small_problem_xla_fallback=True,
                             small_problem_flops=10_000_000):
    """Build a jitted forward(x) for AdaptiveInhibition.

    weight: [D_in, E] (transposed from PyTorch's Linear [out, in]);
    bias / slow_modulation: [E]; adaptive_threshold: [1].
    Parameters are padded + cast to bf16 ONCE here (hoisted out of the per-call path).
    """
    D_in, E = weight.shape

    # --- shrink default tiles until the double-buffered working set fits VMEM ---
    def _ws_bytes(tm_, tn_, tk_):
        return (2 * tm_ * tk_ * 2                    # x double buffer (bf16)
                + max(2, w_buffer_count) * tk_ * tn_ * 2   # W buffers (bf16)
                + 2 * tm_ * tn_ * 4                  # out double buffer (f32)
                + 2 * 2 * tn_ * 4)                   # packed bias/slow
    while _ws_bytes(tm, tn, tk) > _VMEM_BUDGET and tk > _LANE:
        tk = max(_LANE, _round_up(tk // 2, _LANE))
    while _ws_bytes(tm, tn, tk) > _VMEM_BUDGET and tn > _LANE:
        tn = max(_LANE, _round_up(tn // 2, _LANE))

    # --- N / K tiling is fixed by the (static) parameter shapes ---
    tn, grid_n = _balanced_tile(E, tn, _LANE)
    tk, grid_k = _balanced_tile(D_in, tk, _LANE)
    E_pad = grid_n * tn
    D_pad = grid_k * tk

    # --- pad + cast the static parameters ONCE (outside the per-call path) ---
    w_p = jnp.pad(weight, ((0, D_pad - D_in), (0, E_pad - E))).astype(jnp.bfloat16)
    bs = jnp.stack([
        jnp.pad(bias.astype(jnp.float32), (0, E_pad - E)),
        jnp.pad(slow_modulation.astype(jnp.float32), (0, E_pad - E)),
    ], axis=0)
    thr = adaptive_threshold.astype(jnp.float32).reshape((1,))

    @jax.jit
    def forward(x):
        B = x.shape[0]

        # Small-problem fallback: pad/launch fixed cost dominates, plain XLA wins.
        if small_problem_xla_fallback and 2 * B * D_in * E < small_problem_flops:
            fast = jax.nn.sigmoid(x @ weight + bias)
            inhib = fast * slow_modulation
            return jnp.where(inhib > adaptive_threshold[0], inhib, 0.0)

        tm_b, grid_m = _balanced_tile(B, tm, _SUBLANE)
        # v7x has 2 TensorCores sharded over "parallel" axes: make sure at least
        # one parallel axis has >= 2 blocks when the grid would collapse to (1,1,K).
        if grid_m == 1 and grid_n == 1 and _round_up(B, _SUBLANE) >= 2 * _SUBLANE:
            tm_b = _round_up(pl.cdiv(_round_up(B, _SUBLANE), 2), _SUBLANE)
            grid_m = 2
        B_pad = grid_m * tm_b

        x_p = x.astype(jnp.bfloat16)
        if B_pad != B or D_pad != D_in:
            x_p = jnp.pad(x_p, ((0, B_pad - B), (0, D_pad - D_in)))

        grid = (grid_m, grid_n, grid_k)

        cost = pl.CostEstimate(
            flops=2 * B_pad * D_pad * E_pad,
            transcendentals=B_pad * E_pad,
            bytes_accessed=(2 * (B_pad * D_pad + D_pad * E_pad)
                            + 4 * (B_pad * E_pad + 2 * E_pad + 1)),
        )

        # Optional deeper buffering of the weight stream (v5e, W-stream bound).
        w_spec_kwargs = {}
        if w_buffer_count != 2:
            w_spec_kwargs["pipeline_mode"] = pl.Buffered(w_buffer_count)

        # Explicit scoped-VMEM limit: v5e defaults to only 16 MiB; cap at v7x's
        # 64 MiB physical.
        vmem_limit = int(min(max(2 * _ws_bytes(tm_b, tn, tk), 48 * 1024 * 1024),
                             64 * 1024 * 1024))

        out_pad = pl.pallas_call(
            _adaptive_inhibition_kernel,
            out_shape=jax.ShapeDtypeStruct((B_pad, E_pad), jnp.float32),
            grid_spec=pltpu.PrefetchScalarGridSpec(
                num_scalar_prefetch=0,
                grid=grid,
                in_specs=[
                    # threshold scalar: whole array resident in SMEM
                    pl.BlockSpec(memory_space=pltpu.SMEM),
                    # x tile [tm_b, tk] (bf16)
                    pl.BlockSpec((tm_b, tk), lambda i, j, k: (i, k)),
                    # weight tile [tk, tn] (bf16)
                    pl.BlockSpec((tk, tn), lambda i, j, k: (k, j),
                                 **w_spec_kwargs),
                    # packed bias/slow [2, tn] (f32)
                    pl.BlockSpec((2, tn), lambda i, j, k: (0, j)),
                ],
                out_specs=pl.BlockSpec((tm_b, tn), lambda i, j, k: (i, j)),
            ),
            compiler_params=pltpu.CompilerParams(
                dimension_semantics=("parallel", "parallel", "arbitrary"),
                vmem_limit_bytes=vmem_limit,
            ),
            cost_estimate=cost,
        )(thr, x_p, w_p, bs)

        return out_pad[:B, :E]

    return forward


def reference_f32(x, weight, bias, slow_modulation, adaptive_threshold):
    fast = jax.nn.sigmoid(x @ weight + bias)
    inhib = fast * slow_modulation
    return jnp.where(inhib > adaptive_threshold[0], inhib, 0.0)


def reference_bf16(x, weight, bias, slow_modulation, adaptive_threshold):
    # Mirrors the kernel numerics: bf16 MXU inputs, f32 accumulation + epilogue.
    z = jnp.dot(x.astype(jnp.bfloat16), weight.astype(jnp.bfloat16),
                preferred_element_type=jnp.float32) + bias
    inhib = jax.nn.sigmoid(z) * slow_modulation
    return jnp.where(inhib > adaptive_threshold[0], inhib, 0.0)


if __name__ == "__main__":
    # Module config: input_dim=32 -> encoding_dim = max(32, int(log2(32))) = 32
    input_dim = 32
    encoding_dim = max(32, int(jnp.log2(jnp.float32(input_dim))))
    batch = 8

    key = jax.random.PRNGKey(0)
    kx, kw, kb = jax.random.split(key, 3)

    x = jax.random.normal(kx, (batch, input_dim), dtype=jnp.float32)

    # Deterministic parameter init (mimics nn.Linear uniform(-1/sqrt(in), 1/sqrt(in)))
    bound = 1.0 / jnp.sqrt(jnp.float32(input_dim))
    weight = jax.random.uniform(
        kw, (input_dim, encoding_dim), minval=-bound, maxval=bound, dtype=jnp.float32
    )
    bias = jax.random.uniform(
        kb, (encoding_dim,), minval=-bound, maxval=bound, dtype=jnp.float32
    )
    slow_modulation = jnp.full((encoding_dim,), 0.5, dtype=jnp.float32)
    adaptive_threshold = jnp.full((1,), 0.1, dtype=jnp.float32)

    # Disable the small-shape XLA fallback so the Pallas kernel itself is exercised.
    forward = make_adaptive_inhibition(
        weight, bias, slow_modulation, adaptive_threshold,
        small_problem_xla_fallback=False,
    )

    out = jax.block_until_ready(forward(x))
    assert out.shape == (batch, encoding_dim)

    # Exact-path check against a reference with the same bf16-matmul numerics.
    ref_bf16 = reference_bf16(x, weight, bias, slow_modulation, adaptive_threshold)
    assert jnp.allclose(out, ref_bf16, atol=1e-4, rtol=1e-4), "mismatch vs bf16 reference"

    print("KERNEL_OK")
</pallas_src>

<mosaic_0001>
module attributes {stable_mosaic.version = 11 : i64} {
  func.func @_adaptive_inhibition_kernel(%arg0: i32, %arg1: i32, %arg2: i32, %arg3: memref<1xf32, #tpu.memory_space<smem>>, %arg4: memref<16x128xbf16, #tpu.memory_space<vmem>>, %arg5: memref<128x128xbf16, #tpu.memory_space<vmem>>, %arg6: memref<2x128xf32, #tpu.memory_space<vmem>>, %arg7: memref<16x128xf32, #tpu.memory_space<vmem>>) attributes {dimension_semantics = [#tpu.dimension_semantics<parallel>, #tpu.dimension_semantics<parallel>, #tpu.dimension_semantics<arbitrary>], iteration_bounds = array<i64: 1, 1, 1>, scalar_prefetch = 0 : i64, scratch_operands = 0 : i64, tpu.core_type = #tpu.core_type<tc>, window_params = [{transform_indices = @transform_0, window_bounds = array<i64: 1>}, {transform_indices = @transform_1, window_bounds = array<i64: 16, 128>}, {transform_indices = @transform_2, window_bounds = array<i64: 128, 128>}, {transform_indices = @transform_3, window_bounds = array<i64: 2, 128>}, {transform_indices = @transform_4, window_bounds = array<i64: 16, 128>}]} {
    %c0_i32 = arith.constant 0 : i32
    %0 = arith.cmpi eq, %arg2, %c0_i32 : i32
    %1 = arith.extui %0 : i1 to i32
    %c0_i32_0 = arith.constant 0 : i32
    %2 = arith.cmpi ne, %1, %c0_i32_0 : i32
    scf.if %2 {
      %cst_10 = arith.constant 0.000000e+00 : f32
      %12 = vector.broadcast %cst_10 : f32 to vector<16x128xf32>
      %c0_11 = arith.constant 0 : index
      %c0_12 = arith.constant 0 : index
      %13 = vector.load %arg7[%c0_11, %c0_12] : memref<16x128xf32, #tpu.memory_space<vmem>>, vector<16x128xf32>
      tpu.vector_store %arg7[%c0_11, %c0_12], %12 {strides = array<i32>} : memref<16x128xf32, #tpu.memory_space<vmem>>, vector<16x128xf32>,
    } else {
    }
    %c0 = arith.constant 0 : index
    %c0_1 = arith.constant 0 : index
    %3 = vector.load %arg7[%c0, %c0_1] : memref<16x128xf32, #tpu.memory_space<vmem>>, vector<16x128xf32>
    %c0_2 = arith.constant 0 : index
    %c0_3 = arith.constant 0 : index
    %4 = vector.load %arg4[%c0_2, %c0_3] : memref<16x128xbf16, #tpu.memory_space<vmem>>, vector<16x128xbf16>
    %c0_4 = arith.constant 0 : index
    %c0_5 = arith.constant 0 : index
    %5 = vector.load %arg5[%c0_4, %c0_5] : memref<128x128xbf16, #tpu.memory_space<vmem>>, vector<128x128xbf16>
    %cst = arith.constant dense<0.000000e+00> : vector<16x128xf32>
    %6 = tpu.matmul %4, %5, %cst {dimension_numbers = #tpu.dot_dimension_numbers<[1], [0], [0], [1], [0, 0, 1, 1], [], []>} : vector<16x128xbf16>, vector<128x128xbf16>, vector<16x128xf32> -> vector<16x128xf32>
    %7 = arith.addf %3, %6 : vector<16x128xf32>
    %c0_6 = arith.constant 0 : index
    %c0_7 = arith.constant 0 : index
    %8 = vector.load %arg7[%c0_6, %c0_7] : memref<16x128xf32, #tpu.memory_space<vmem>>, vector<16x128xf32>
    tpu.vector_store %arg7[%c0_6, %c0_7], %7 {strides = array<i32>} : memref<16x128xf32, #tpu.memory_space<vmem>>, vector<16x128xf32>,
    %c0_i32_8 = arith.constant 0 : i32
    %9 = arith.cmpi eq, %arg2, %c0_i32_8 : i32
    %10 = arith.extui %9 : i1 to i32
    %c0_i32_9 = arith.constant 0 : i32
    %11 = arith.cmpi ne, %10, %c0_i32_9 : i32
    scf.if %11 {
      %c0_10 = arith.constant 0 : index
      %c0_11 = arith.constant 0 : index
      %12 = vector.load %arg6[%c0_10, %c0_11] : memref<2x128xf32, #tpu.memory_space<vmem>>, vector<1x128xf32>
      %c1 = arith.constant 1 : index
      %c0_12 = arith.constant 0 : index
      %13 = vector.load %arg6[%c1, %c0_12] : memref<2x128xf32, #tpu.memory_space<vmem>>, vector<1x128xf32>
      %c0_13 = arith.constant 0 : index
      %c0_14 = arith.constant 0 : index
      %14 = vector.load %arg7[%c0_13, %c0_14] : memref<16x128xf32, #tpu.memory_space<vmem>>, vector<16x128xf32>
      %15 = vector.broadcast %12 : vector<1x128xf32> to vector<16x128xf32>
      %16 = arith.addf %14, %15 : vector<16x128xf32>
      %17 = arith.negf %16 : vector<16x128xf32>
      %18 = math.exp %17 : vector<16x128xf32>
      %cst_15 = arith.constant 1.000000e+00 : f32
      %19 = vector.broadcast %cst_15 : f32 to vector<16x128xf32>
      %20 = arith.addf %19, %18 : vector<16x128xf32>
      %21 = arith.divf %19, %20 : vector<16x128xf32>
      %22 = vector.broadcast %13 : vector<1x128xf32> to vector<16x128xf32>
      %23 = arith.mulf %21, %22 : vector<16x128xf32>
      %c0_16 = arith.constant 0 : index
      %24 = memref.load %arg3[%c0_16] : memref<1xf32, #tpu.memory_space<smem>>
      %25 = vector.broadcast %24 : f32 to vector<16x128xf32>
      %26 = arith.cmpf ogt, %23, %25 : vector<16x128xf32>
      %cst_17 = arith.constant 0.000000e+00 : f32
      %27 = vector.broadcast %cst_17 : f32 to vector<16x128xf32>
      %28 = arith.select %26, %23, %27 : vector<16x128xi1>, vector<16x128xf32>
      %c0_18 = arith.constant 0 : index
      %c0_19 = arith.constant 0 : index
      %29 = vector.load %arg7[%c0_18, %c0_19] : memref<16x128xf32, #tpu.memory_space<vmem>>, vector<16x128xf32>
      tpu.vector_store %arg7[%c0_18, %c0_19], %28 {strides = array<i32>} : memref<16x128xf32, #tpu.memory_space<vmem>>, vector<16x128xf32>,
    } else {
    }
    return
  }
  func.func @transform_0(%arg0: i32, %arg1: i32, %arg2: i32) -> i32 {
    %c0_i32 = arith.constant 0 : i32
    %c0_i32_0 = arith.constant 0 : i32
    return %c0_i32 : i32
  }
  func.func @transform_1(%arg0: i32, %arg1: i32, %arg2: i32) -> (i32, i32) {
    %c0_i32 = arith.constant 0 : i32
    return %arg0, %arg2 : i32, i32
  }
  func.func @transform_2(%arg0: i32, %arg1: i32, %arg2: i32) -> (i32, i32) {
    %c0_i32 = arith.constant 0 : i32
    return %arg2, %arg1 : i32, i32
  }
  func.func @transform_3(%arg0: i32, %arg1: i32, %arg2: i32) -> (i32, i32) {
    %c0_i32 = arith.constant 0 : i32
    %c0_i32_0 = arith.constant 0 : i32
    return %c0_i32, %arg1 : i32, i32
  }
  func.func @transform_4(%arg0: i32, %arg1: i32, %arg2: i32) -> (i32, i32) {
    %c0_i32 = arith.constant 0 : i32
    return %arg0, %arg1 : i32, i32
  }
}

</mosaic_0001>

<llo_original>
// kernel: forward.1
$region0: #{forward.1}
  #allocation0 [shape = 'u32[]', space=smem, size = 0x4, offset = 0x4, fixed_abs, tag = 'smem constant byte address 0x4 - core index']
  #allocation1 [shape = 'u32[144,128]{1,0:T(1,128)}', space=vmem, size = 0x12000, scoped, tag = 'internal scratch']
  #allocation2 [shape = 'f32[1]{0:T(128)S(6)}', space=smem, size = 0x200, scoped, tag = 'scoped memory for forward.1']
  %s0 = inlined_call_operand.<no memory space> [shape: f32[1], index: 0, kind: input, shape index: {}]
  %s1 = inlined_call_operand.vmem [shape: bf16[16,128], index: 1, kind: input, shape index: {}]
  %s2 = inlined_call_operand.hbm [shape: bf16[128,128], index: 2, kind: input, shape index: {}]
  %s3 = inlined_call_operand.vmem [shape: f32[2,128], index: 3, kind: input, shape index: {}]
  %s4 = inlined_call_operand.vmem [shape: f32[16,128], index: 4, kind: output, shape index: {}]
  %s5 = sld [smem:[#allocation0]]
  $region38: #{forward.1} parent=0
    _
  %s7 = ssub.s32 1, %s5
  %s8 = scalar_select 0, %s7, %s5
  %9 = sst [smem:[#allocation2]] %s0
  $region1: #{forward.1} parent=0
    #allocation3 [shape = 'u8[32768]{0}', space=vmem, size = 0x8000, scoped, tag = 'input window, operand 2, single buffered']
    #allocation4 [shape = 's32[1]{0}', space=sflag, size = 0x4, scoped, tag = 'scoped memory for forward.1']
    %10 = vsyncpa [#allocation4], 0
    // Predicated region
    $region2: #{forward.1} parent=1 // pred_check
      _
    $region3: #{forward.1} parent=1 // pred_check_branch
      %12 = sbr.rel (0) target = $region5
    $region4: #{forward.1} parent=1 // pred_region
      _
    $region5: #{forward.1} parent=1 // pred_fallthru
      _
    // Predicated region
    $region6: #{forward.1} parent=1 // pred_check
      _
    $region7: #{forward.1} parent=1 // pred_check_branch
      %14 = sbr.rel (0) target = $region9
    $region8: #{forward.1} parent=1 // pred_region
      _
    $region9: #{forward.1} parent=1 // pred_fallthru
      _
    // Predicated region
    $region10: #{forward.1} parent=1 // pred_check
      _
    $region11: #{forward.1} parent=1 // pred_check_branch
      %16 = sbr.rel (0) target = $region13
    $region12: #{forward.1} parent=1 // pred_region
      %s18 = ssub.s32 1024, 1024
      %19 = vsyncadd [#allocation4], %s18
      %s20 = sshll.u32 [#allocation3], 4
      %s21 = int_to_ptr.vmem [resolvable:$true] %s20
      %26 = dma.hbm_to_vmem [thread:$0]  %s2, 1024, %s21, [#allocation4], 64, 64, 4
    $region13: #{forward.1} parent=1 // pred_fallthru
      _
    // Predicated region
    $region14: #{forward.1} parent=1 // pred_check
      _
    $region15: #{forward.1} parent=1 // pred_check_branch
      %28 = sbr.rel (0) target = $region17
    $region16: #{forward.1} parent=1 // pred_region
      _
    $region17: #{forward.1} parent=1 // pred_fallthru
      _
    // Predicated region
    $region18: #{forward.1} parent=1 // pred_check
      _
    $region19: #{forward.1} parent=1 // pred_check_branch
      %30 = sbr.rel (0) target = $region21
    $region20: #{forward.1} parent=1 // pred_region
      %31 = dma.done [#allocation4], 1024
    $region21: #{forward.1} parent=1 // pred_fallthru
      _
    %p33 = scmp.eq.s32.totalorder 0, 0
    // Predicated region
    $region22: #{forward.1} parent=1 // pred_check
      %p34 = pneg %p33
    $region23: #{forward.1} parent=1 // pred_check_branch
      %36 = sbr.rel (%p34) target = $region25
    $region24: #{forward.1} parent=1 // pred_region
      %37 = vst [vmem:[%s4] sm:$0xff] 0.0
      %38 = vst [vmem:[%s4 + $0x8] sm:$0xff] 0.0
    $region25: #{forward.1} parent=1 // pred_fallthru
      _
    %v39 = vld [vmem:[%s4] sm:$0xff]
    %v40 = vld [vmem:[%s4 + $0x8] sm:$0xff]
    %v41 = vld [vmem:[%s1] sm:$0xf]
    %v42 = vld [vmem:[%s1 + $0x4] sm:$0xf]
    %v43 = vld [vmem:[#allocation3] sm:$0xf]
    %v44 = vld [vmem:[#allocation3 + $0x4] sm:$0xf]
    %v45 = vld [vmem:[#allocation3 + $0x8] sm:$0xf]
    %v46 = vld [vmem:[#allocation3 + $0xc] sm:$0xf]
    %v47 = vld [vmem:[#allocation3 + $0x10] sm:$0xf]
    %v48 = vld [vmem:[#allocation3 + $0x14] sm:$0xf]
    %v49 = vld [vmem:[#allocation3 + $0x18] sm:$0xf]
    %v50 = vld [vmem:[#allocation3 + $0x1c] sm:$0xf]
    %v51 = vld [vmem:[#allocation3 + $0x20] sm:$0xf]
    %v52 = vld [vmem:[#allocation3 + $0x24] sm:$0xf]
    %v53 = vld [vmem:[#allocation3 + $0x28] sm:$0xf]
    %v54 = vld [vmem:[#allocation3 + $0x2c] sm:$0xf]
    %v55 = vld [vmem:[#allocation3 + $0x30] sm:$0xf]
    %v56 = vld [vmem:[#allocation3 + $0x34] sm:$0xf]
    %v57 = vld [vmem:[#allocation3 + $0x38] sm:$0xf]
    %v58 = vld [vmem:[#allocation3 + $0x3c] sm:$0xf]
    %v61 = vunpack.c.l.b16 %v41
    %v62 = vunpack.c.l.b16 %v42
    %v63 = vpack.c.b16 %v62, %v61
    %v81 = vunpack.c.l.b16 %v43
    %v82 = vunpack.c.l.b16 %v44
    %v83 = vunpack.c.l.b16 %v45
    %v84 = vunpack.c.l.b16 %v46
    %v85 = vunpack.c.l.b16 %v47
    %v86 = vunpack.c.l.b16 %v48
    %v87 = vunpack.c.l.b16 %v49
    %v88 = vunpack.c.l.b16 %v50
    %v89 = vunpack.c.l.b16 %v51
    %v90 = vunpack.c.l.b16 %v52
    %v91 = vunpack.c.l.b16 %v53
    %v92 = vunpack.c.l.b16 %v54
    %v93 = vunpack.c.l.b16 %v55
    %v94 = vunpack.c.l.b16 %v56
    %v95 = vunpack.c.l.b16 %v57
    %v96 = vunpack.c.l.b16 %v58
    %v97 = vpack.c.b16 %v82, %v81
    %v98 = vpack.c.b16 %v84, %v83
    %v99 = vpack.c.b16 %v86, %v85
    %v100 = vpack.c.b16 %v88, %v87
    %v101 = vpack.c.b16 %v90, %v89
    %v102 = vpack.c.b16 %v92, %v91
    %v103 = vpack.c.b16 %v94, %v93
    %v104 = vpack.c.b16 %v96, %v95
    %113 = vmatprep.subr.bf16.mxu0 0
    %114 = vmatpush1.bf16.msra.mxu0 %v104
    %115 = vmatprep.subr.bf16.mxu0 0
    %116 = vmatpush1.bf16.msra.mxu0 %v103
    %117 = vmatprep.subr.bf16.mxu0 0
    %118 = vmatpush1.bf16.msra.mxu0 %v102
    %119 = vmatprep.subr.bf16.mxu0 0
    %120 = vmatpush1.bf16.msra.mxu0 %v101
    %121 = vmatprep.subr.bf16.mxu0 0
    %122 = vmatpush1.bf16.msra.mxu0 %v100
    %123 = vmatprep.subr.bf16.mxu0 0
    %124 = vmatpush1.bf16.msra.mxu0 %v99
    %125 = vmatprep.subr.bf16.mxu0 0
    %126 = vmatpush1.bf16.msra.mxu0 %v98
    %127 = vmatprep.subr.bf16.mxu0 0
    %128 = vmatpush1.bf16.msra.mxu0 %v97
    %129 = vmatprep.subr.bf16.mxu0 0
    %130 = vmatpush2.bf16.msra.mxu0 0
    %131 = vmatprep.subr.bf16.mxu0 0
    %132 = vmatpush2.bf16.msra.mxu0 0
    %133 = vmatprep.subr.bf16.mxu0 0
    %134 = vmatpush2.bf16.msra.mxu0 0
    %135 = vmatprep.subr.bf16.mxu0 0
    %136 = vmatpush2.bf16.msra.mxu0 0
    %137 = vmatprep.subr.bf16.mxu0 0
    %138 = vmatpush2.bf16.msra.mxu0 0
    %139 = vmatprep.subr.bf16.mxu0 0
    %140 = vmatpush2.bf16.msra.mxu0 0
    %141 = vmatprep.subr.bf16.mxu0 0
    %142 = vmatpush2.bf16.msra.mxu0 0
    %143 = vmatprep.subr.bf16.mxu0 0
    %144 = vmatpush2.bf16.msra.mxu0 0
    %145 = vmatprep.mubr.bf16.mxu0 0
    %146 = vmatmul.mubr.bf16.gmra.mxu0 %v63
    %v147 = vpop.f32.mrf.mxu0
    %v148 = vadd.f32 0.0, %v147
    %v149 = vpop.f32.mrf.mxu0
    %v150 = vpop.f32.mrf.mxu0
    %v151 = vadd.f32 0.0, %v150
    %v152 = vpop.f32.mrf.mxu0
    %153 = vdwg.mxu0
    %v154 = vadd.f32 %v39, %v148
    %v155 = vadd.f32 %v40, %v151
    %156 = vst [vmem:[%s4] sm:$0xff] %v154
    %157 = vst [vmem:[%s4 + $0x8] sm:$0xff] %v155
    // Predicated region
    $region26: #{forward.1} parent=1 // pred_check
      %p158 = pneg %p33
    $region27: #{forward.1} parent=1 // pred_check_branch
      %160 = sbr.rel (%p158) target = $region29
    $region28: #{forward.1} parent=1 // pred_region
      %v161 = vld [vmem:[%s3] sm:$0x1]
      %v162 = vld [vmem:[%s3 + $0x1] sm:$0x1]
      %v163 = vld [vmem:[%s4] sm:$0xff]
      %v164 = vld [vmem:[%s4 + $0x8] sm:$0xff]
      %v165 = vlaneseq
      %v166 = vshrl.u32 %v165, 7
      %v167 = vsub.s32 0, %v166
      %v168 = vrot.slane %v161, %v167
      %v169 = vadd.f32 %v163, %v168
      %v170 = vadd.f32 %v164, %v168
      %v171 = vxor.u32 %v169, 2147483648
      %v172 = vxor.u32 %v170, 2147483648
      %v173 = vmul.f32 %v171, 1.442695
      %v174 = vpow.pop %v173
      %v175 = vmul.f32 %v172, 1.442695
      %v176 = vpow.pop %v175
      %v177 = vadd.f32 %v174, 1.0
      %v178 = vadd.f32 %v176, 1.0
      %v179 = vrcp.pop %v177
      %v180 = vmul.f32 1.0, %v179
      %v181 = vrcp.pop %v178
      %v182 = vmul.f32 1.0, %v181
      %v183 = vlaneseq
      %v184 = vshrl.u32 %v183, 7
      %v185 = vsub.s32 0, %v184
      %v186 = vrot.slane %v162, %v185
      %v187 = vmul.f32 %v180, %v186
      %v188 = vmul.f32 %v182, %v186
      %s189 = sld [smem:[#allocation2]]
      %v190 = vstv %s189
      %vm191 = vcmp.gt.f32.partialorder %v187, %v190
      %vm192 = vcmp.gt.f32.partialorder %v188, %v190
      %v193 = vsel %vm191, %v187, 0.0
      %v194 = vsel %vm192, %v188, 0.0
      %195 = vst [vmem:[%s4] sm:$0xff] %v193
      %196 = vst [vmem:[%s4 + $0x8] sm:$0xff] %v194
    $region29: #{forward.1} parent=1 // pred_fallthru
      _
    // Predicated region
    $region30: #{forward.1} parent=1 // pred_check
      _
    $region31: #{forward.1} parent=1 // pred_check_branch
      %198 = sbr.rel (0) target = $region33
    $region32: #{forward.1} parent=1 // pred_region
      _
    $region33: #{forward.1} parent=1 // pred_fallthru
      _
    // Predicated region
    $region34: #{forward.1} parent=1 // pred_check
      _
    $region35: #{forward.1} parent=1 // pred_check_branch
      %200 = sbr.rel (0) target = $region37
    $region36: #{forward.1} parent=1 // pred_region
      _
    $region37: #{forward.1} parent=1 // pred_fallthru
      _
    %201 = vsyncpa [#allocation4], 1

</llo_original>
